<compile_context>
chip_gen: v5e
topology: v5e:2x2
jax: 0.10.0
libtpu: 0.0.40
codegen_flags: <defaults>
</compile_context>

<pallas_src>
import functools

import jax
import jax.numpy as jnp
from jax.experimental import pallas as pl
from jax.experimental.pallas import tpu as pltpu


def _round_up(x, m):
    return (x + m - 1) // m * m


def head_quantize_kernel(emb_ref, w_ref, b_ref, q_ref, loss_ref, *,
                         true_b, tile_b, ragged):
    """One batch tile: Linear head + binary quantize + partial commit-loss sum.

    emb_ref : (TB, D)      f32 or bf16 (cast to bf16 in-kernel if needed)
    w_ref   : (D, F_pad)   bf16   (pre-transposed, zero-padded, resident)
    b_ref   : (1, F_pad)   f32    (zero-padded, resident)
    q_ref   : (TB, F_pad)  bf16   output (0/1, exact)
    loss_ref: (1, 8, 128)  f32    per-tile partial SUM of (q - feats)^2
    """
    i = pl.program_id(0)

    emb = emb_ref[...]
    if emb.dtype != jnp.bfloat16:
        emb = emb.astype(jnp.bfloat16)          # cast right before the MXU op

    # deit.head : Linear(embed_dim, features)  -- MXU, f32 accumulation.
    feats = jnp.dot(emb, w_ref[...],
                    preferred_element_type=jnp.float32) + b_ref[...]

    # bin_quantize: VectorQuantize(dim=1, codebook=[[0.],[1.]]) == nearest of {0,1}.
    # (tie at exactly 0.5 maps to 0, matching argmin-first codebook order.)
    q = jnp.where(feats > 0.5, 1.0, 0.0)
    q_ref[...] = q.astype(q_ref.dtype)

    # Commitment-loss partial sum.  Padded feature columns are exactly zero
    # (zero weight column + zero bias -> feats == 0 -> q == 0 -> err == 0), so
    # they never contribute.  Batch rows only need masking on the ragged last
    # tile, where the OOB input rows contain garbage.
    err = q - feats

    if ragged:
        last = pl.num_programs(0) - 1

        @pl.when(i != last)
        def _():
            loss_ref[...] = jnp.full(loss_ref.shape, jnp.sum(err * err),
                                     dtype=jnp.float32)

        @pl.when(i == last)
        def _():
            row = jax.lax.broadcasted_iota(jnp.int32, err.shape, 0) + i * tile_b
            m = jnp.where(row < true_b, err, 0.0)
            loss_ref[...] = jnp.full(loss_ref.shape, jnp.sum(m * m),
                                     dtype=jnp.float32)
    else:
        loss_ref[...] = jnp.full(loss_ref.shape, jnp.sum(err * err),
                                 dtype=jnp.float32)


def padded_feature_dim(features):
    # Full MXU result width on v6e/v7x (256x256) when features > 128; a multiple
    # of 256 is also a multiple of 128, so it remains valid on v5e.
    return _round_up(features, 256) if features > 128 else _round_up(features, 128)


def prepare_head_weights(w, b):
    """One-time layout prep for the frozen deit.head weights.

    Call ONCE (outside the steady-state forward) and pass the results to
    res_extr_forward.  Returns:
      wT_pad : (D, F_pad) bf16   transposed + zero-padded weight
      b_pad  : (1, F_pad) f32    zero-padded bias
    """
    F, D = w.shape
    F_pad = padded_feature_dim(F)
    wT_pad = jnp.zeros((D, F_pad), jnp.bfloat16).at[:, :F].set(
        w.T.astype(jnp.bfloat16))
    b_pad = jnp.zeros((1, F_pad), jnp.float32).at[:, :F].set(
        b.astype(jnp.float32))
    return wT_pad, b_pad


def _pick_batch_tile(B, tb):
    if B <= 8:
        return B                                   # single tile == full array dim
    # >= 2 tiles whenever possible so v7x's second TensorCore gets work.
    return max(8, min(tb, _round_up((B + 1) // 2, 8)))


def _res_extr_forward(emb, wT_pad, b_pad, pm, *, features, tb=2048):
    """Steady-state forward.

    Returns (q_pad (B, F_pad) bf16 lane-dense, total_commit_loss scalar f32,
    quantized_predicate_matrix (C, F) f32).  q_pad[:, :features] is the
    module-equivalent output; keep it padded if the downstream op can consume it.
    """
    B, D = emb.shape
    F = features
    F_pad = wT_pad.shape[1]

    TB = _pick_batch_tile(B, tb)
    num_tiles = -(-B // TB)
    ragged = (B % TB) != 0

    kernel = functools.partial(head_quantize_kernel,
                               true_b=B, tile_b=TB, ragged=ragged)

    q_pad, loss_tiles = pl.pallas_call(
        kernel,
        out_shape=(
            jax.ShapeDtypeStruct((B, F_pad), jnp.bfloat16),
            jax.ShapeDtypeStruct((num_tiles, 8, 128), jnp.float32),
        ),
        grid=(num_tiles,),
        in_specs=[
            pl.BlockSpec((TB, D), lambda i: (i, 0)),        # streamed per tile
            pl.BlockSpec((D, F_pad), lambda i: (0, 0)),     # resident weight
            pl.BlockSpec((1, F_pad), lambda i: (0, 0)),     # resident bias
        ],
        out_specs=(
            pl.BlockSpec((TB, F_pad), lambda i: (i, 0)),    # lane-dense writeback
            pl.BlockSpec((1, 8, 128), lambda i: (i, 0, 0)), # per-tile partial loss
        ),
        compiler_params=pltpu.CompilerParams(
            dimension_semantics=("parallel",),              # megacore on v7x
            vmem_limit_bytes=32 * 1024 * 1024,
        ),
    )(emb, wT_pad, b_pad)

    # Predicate-matrix binary quantization + its commitment loss: tiny (C, F)
    # elementwise + mean -- plain XLA in the wrapper (cheaper than a kernel launch).
    pm_f32 = pm.astype(jnp.float32)
    pmq = jnp.where(pm_f32 > 0.5, 1.0, 0.0)
    pm_loss = jnp.mean(jnp.square(pmq - pm_f32))

    commit_loss = jnp.sum(loss_tiles[:, 0, 0]) / (B * F)    # mean over true B*F
    total_loss = commit_loss + pm_loss
    return q_pad, total_loss, pmq


res_extr_forward = jax.jit(_res_extr_forward, static_argnames=("features", "tb"))


def res_extr_reference(emb, w, b, pm):
    # Reference replicates the kernel's numerics path (bf16 matmul, f32 accumulate).
    feats = jnp.dot(emb.astype(jnp.bfloat16), w.astype(jnp.bfloat16).T,
                    preferred_element_type=jnp.float32) + b[None, :].astype(jnp.float32)
    q = (feats > 0.5).astype(jnp.float32)
    pmq = (pm > 0.5).astype(jnp.float32)
    loss = jnp.mean((q - feats) ** 2) + jnp.mean((pmq - pm) ** 2)
    return q, loss, pmq


def _run_case(key, batch, embed_dim, features, classes, tb=2048):
    k_emb, k_w, k_b, k_pm = jax.random.split(key, 4)
    emb = jax.random.normal(k_emb, (batch, embed_dim), jnp.float32)
    w = jax.random.normal(k_w, (features, embed_dim), jnp.float32) * 0.1
    b = jax.random.normal(k_b, (features,), jnp.float32) * 0.1
    pm = jax.random.normal(k_pm, (classes, features), jnp.float32)

    # Weight prep hoisted out of the steady-state forward (frozen weights).
    wT_pad, b_pad = prepare_head_weights(w, b)

    q_pad, loss, pmq = res_extr_forward(emb, wT_pad, b_pad, pm,
                                        features=features, tb=tb)
    jax.block_until_ready((q_pad, loss, pmq))

    # Module-exact shape only needed here, for the check; downstream consumers
    # should keep the padded, lane-dense q (and a padded PM) to avoid this pass.
    q = q_pad[:, :features]

    q_ref, loss_ref, pmq_ref = res_extr_reference(emb, w, b, pm)
    assert q.shape == (batch, features) and q.dtype == jnp.bfloat16
    assert jnp.allclose(q.astype(jnp.float32), q_ref), "quantized features mismatch"
    assert jnp.allclose(pmq, pmq_ref), "quantized predicate matrix mismatch"
    assert jnp.allclose(loss, loss_ref, rtol=1e-4, atol=1e-4), "commit loss mismatch"


if __name__ == "__main__":
    # Small shapes consistent with the module (deit embedding -> head -> VQ).
    key = jax.random.PRNGKey(0)
    k1, k2 = jax.random.split(key)

    # Primary case: batch=2, embed_dim=32 (stand-in for 512), features=16, classes=8.
    _run_case(k1, batch=2, embed_dim=32, features=16, classes=8)

    # Secondary case exercising the multi-tile + ragged-last-tile path
    # (batch=20 -> TB=16, 2 tiles, last tile has 4 valid rows).
    _run_case(k2, batch=20, embed_dim=32, features=16, classes=8, tb=16)

    print("KERNEL_OK")
</pallas_src>

<mosaic_0001>
module attributes {stable_mosaic.version = 11 : i64} {
  func.func @head_quantize_kernel(%arg0: i32, %arg1: memref<2x32xf32, #tpu.memory_space<vmem>>, %arg2: memref<32x128xbf16, #tpu.memory_space<vmem>>, %arg3: memref<1x128xf32, #tpu.memory_space<vmem>>, %arg4: memref<2x128xbf16, #tpu.memory_space<vmem>>, %arg5: memref<1x8x128xf32, #tpu.memory_space<vmem>>) attributes {dimension_semantics = [#tpu.dimension_semantics<parallel>], iteration_bounds = array<i64: 1>, scalar_prefetch = 0 : i64, scratch_operands = 0 : i64, tpu.core_type = #tpu.core_type<tc>, window_params = [{transform_indices = @transform_0, window_bounds = array<i64: 2, 32>}, {pipeline_mode = #tpu.pipeline_mode<synchronous>, transform_indices = @transform_1, window_bounds = array<i64: 32, 128>}, {pipeline_mode = #tpu.pipeline_mode<synchronous>, transform_indices = @transform_2, window_bounds = array<i64: 1, 128>}, {transform_indices = @transform_3, window_bounds = array<i64: 2, 128>}, {transform_indices = @transform_4, window_bounds = array<i64: 1, 8, 128>}]} {
    %c0 = arith.constant 0 : index
    %c0_0 = arith.constant 0 : index
    %0 = vector.load %arg1[%c0, %c0_0] : memref<2x32xf32, #tpu.memory_space<vmem>>, vector<2x32xf32>
    %1 = arith.truncf %0 : vector<2x32xf32> to vector<2x32xbf16>
    %c0_1 = arith.constant 0 : index
    %c0_2 = arith.constant 0 : index
    %2 = vector.load %arg2[%c0_1, %c0_2] : memref<32x128xbf16, #tpu.memory_space<vmem>>, vector<32x128xbf16>
    %cst = arith.constant dense<0.000000e+00> : vector<2x128xf32>
    %3 = tpu.matmul %1, %2, %cst {dimension_numbers = #tpu.dot_dimension_numbers<[1], [0], [0], [1], [0, 0, 1, 1], [], []>} : vector<2x32xbf16>, vector<32x128xbf16>, vector<2x128xf32> -> vector<2x128xf32>
    %c0_3 = arith.constant 0 : index
    %c0_4 = arith.constant 0 : index
    %4 = vector.load %arg3[%c0_3, %c0_4] : memref<1x128xf32, #tpu.memory_space<vmem>>, vector<1x128xf32>
    %5 = vector.broadcast %4 : vector<1x128xf32> to vector<2x128xf32>
    %6 = arith.addf %3, %5 : vector<2x128xf32>
    %cst_5 = arith.constant 5.000000e-01 : f32
    %7 = vector.broadcast %cst_5 : f32 to vector<2x128xf32>
    %8 = arith.cmpf ogt, %6, %7 : vector<2x128xf32>
    %cst_6 = arith.constant 1.000000e+00 : f32
    %cst_7 = arith.constant 0.000000e+00 : f32
    %9 = vector.broadcast %cst_6 : f32 to vector<2x128xf32>
    %10 = vector.broadcast %cst_7 : f32 to vector<2x128xf32>
    %11 = arith.select %8, %9, %10 : vector<2x128xi1>, vector<2x128xf32>
    %12 = arith.truncf %11 : vector<2x128xf32> to vector<2x128xbf16>
    %c0_8 = arith.constant 0 : index
    %c0_9 = arith.constant 0 : index
    %13 = vector.load %arg4[%c0_8, %c0_9] : memref<2x128xbf16, #tpu.memory_space<vmem>>, vector<2x128xbf16>
    tpu.vector_store %arg4[%c0_8, %c0_9], %12 {strides = array<i32>} : memref<2x128xbf16, #tpu.memory_space<vmem>>, vector<2x128xbf16>,
    %14 = arith.subf %11, %6 : vector<2x128xf32>
    %15 = arith.mulf %14, %14 : vector<2x128xf32>
    %16 = vector.shape_cast %15 : vector<2x128xf32> to vector<1x2x128xf32>
    %cst_10 = arith.constant dense<0.000000e+00> : vector<1xf32>
    %17 = vector.multi_reduction <add>, %16, %cst_10 [1, 2] : vector<1x2x128xf32> to vector<1xf32>
    %18 = vector.shape_cast %17 : vector<1xf32> to vector<1x1x1xf32>
    %19 = vector.extract %18[0, 0, 0] : f32 from vector<1x1x1xf32>
    %20 = vector.broadcast %19 : f32 to vector<1x8x128xf32>
    %c0_11 = arith.constant 0 : index
    %c0_12 = arith.constant 0 : index
    %c0_13 = arith.constant 0 : index
    %21 = vector.load %arg5[%c0_11, %c0_12, %c0_13] : memref<1x8x128xf32, #tpu.memory_space<vmem>>, vector<1x8x128xf32>
    tpu.vector_store %arg5[%c0_11, %c0_12, %c0_13], %20 {strides = array<i32>} : memref<1x8x128xf32, #tpu.memory_space<vmem>>, vector<1x8x128xf32>,
    return
  }
  func.func @transform_0(%arg0: i32) -> (i32, i32) {
    %c0_i32 = arith.constant 0 : i32
    %c0_i32_0 = arith.constant 0 : i32
    return %arg0, %c0_i32 : i32, i32
  }
  func.func @transform_1(%arg0: i32) -> (i32, i32) {
    %c0_i32 = arith.constant 0 : i32
    %c0_i32_0 = arith.constant 0 : i32
    %c0_i32_1 = arith.constant 0 : i32
    return %c0_i32, %c0_i32_0 : i32, i32
  }
  func.func @transform_2(%arg0: i32) -> (i32, i32) {
    %c0_i32 = arith.constant 0 : i32
    %c0_i32_0 = arith.constant 0 : i32
    %c0_i32_1 = arith.constant 0 : i32
    return %c0_i32, %c0_i32_0 : i32, i32
  }
  func.func @transform_3(%arg0: i32) -> (i32, i32) {
    %c0_i32 = arith.constant 0 : i32
    %c0_i32_0 = arith.constant 0 : i32
    return %arg0, %c0_i32 : i32, i32
  }
  func.func @transform_4(%arg0: i32) -> (i32, i32, i32) {
    %c0_i32 = arith.constant 0 : i32
    %c0_i32_0 = arith.constant 0 : i32
    %c0_i32_1 = arith.constant 0 : i32
    return %arg0, %c0_i32, %c0_i32_0 : i32, i32, i32
  }
}

</mosaic_0001>

<llo_original>
// kernel: _res_extr_forward.1
$region0: #{_res_extr_forward.1}
  #allocation0 [shape = 'u32[]', space=smem, size = 0x4, offset = 0x4, fixed_abs, tag = 'smem constant byte address 0x4 - core index']
  #allocation1 [shape = 'u32[72,128]{1,0:T(1,128)}', space=vmem, size = 0x9000, scoped, tag = 'internal scratch']
  %s0 = inlined_call_operand.hbm [shape: f32[2,32], index: 0, kind: input, shape index: {}]
  %s1 = inlined_call_operand.hbm [shape: bf16[32,128], index: 1, kind: input, shape index: {}]
  %s2 = inlined_call_operand.hbm [shape: f32[1,128], index: 2, kind: input, shape index: {}]
  %s3 = inlined_call_operand.hbm [shape: bf16[2,128], index: 3, kind: output, shape index: {0}]
  %s4 = inlined_call_operand.vmem [shape: f32[1,8,128], index: 4, kind: output, shape index: {1}]
  %5 = xla_tuple %s3, %s4
  %s6 = sld [smem:[#allocation0]]
  $region42: #{_res_extr_forward.1} parent=0
    _
  %s8 = ssub.s32 1, %s6
  %s9 = scalar_select 0, %s8, %s6
  $region1: #{_res_extr_forward.1} parent=0
    #allocation2 [shape = 'u8[1024]{0}', space=vmem, size = 0x400, scoped, tag = 'input window, operand 0, single buffered']
    #allocation3 [shape = 's32[1]{0}', space=sflag, size = 0x4, scoped, tag = 'scoped memory for _res_extr_forward.1']
    #allocation4 [shape = 's32[1]{0}', space=sflag, size = 0x4, scoped, tag = 'scoped memory for _res_extr_forward.1']
    #allocation5 [shape = 'u8[8192]{0}', space=vmem, size = 0x2000, scoped, tag = 'input window, operand 1, single buffered']
    #allocation6 [shape = 's32[1]{0}', space=sflag, size = 0x4, scoped, tag = 'scoped memory for _res_extr_forward.1']
    #allocation7 [shape = 'u8[512]{0}', space=vmem, size = 0x400, scoped, tag = 'input window, operand 2, single buffered']
    #allocation8 [shape = 'u8[512]{0}', space=vmem, size = 0x400, scoped, tag = 'output window, operand 0, single buffered']
    %10 = vsyncpa [#allocation3], 0
    %11 = vsyncpa [#allocation6], 0
    %12 = vsyncpa [#allocation4], 0
    // Predicated region
    $region2: #{_res_extr_forward.1} parent=1 // pred_check
      _
    $region3: #{_res_extr_forward.1} parent=1 // pred_check_branch
      %14 = sbr.rel (0) target = $region5
    $region4: #{_res_extr_forward.1} parent=1 // pred_region
      %16 = vsyncadd [#allocation3], 0
      %s18 = sshll.u32 %s0, 4
      %s19 = int_to_ptr.hbm [resolvable:$true] %s18
      %s20 = sshll.u32 [#allocation2], 4
      %s21 = int_to_ptr.vmem [resolvable:$true] %s20
      %23 = dma.hbm_to_vmem [thread:$0]  %s19, 32, %s21, [#allocation3]
    $region5: #{_res_extr_forward.1} parent=1 // pred_fallthru
      _
    // Predicated region
    $region6: #{_res_extr_forward.1} parent=1 // pred_check
      _
    $region7: #{_res_extr_forward.1} parent=1 // pred_check_branch
      %25 = sbr.rel (0) target = $region9
    $region8: #{_res_extr_forward.1} parent=1 // pred_region
      %27 = vsyncadd [#allocation6], 0
      %s28 = sshll.u32 %s1, 4
      %s29 = int_to_ptr.hbm [resolvable:$true] %s28
      %s30 = sshll.u32 [#allocation5], 4
      %s31 = int_to_ptr.vmem [resolvable:$true] %s30
      %36 = dma.hbm_to_vmem [thread:$0]  %s29, 256, %s31, [#allocation6], 64, 64, 4
    $region9: #{_res_extr_forward.1} parent=1 // pred_fallthru
      _
    // Predicated region
    $region10: #{_res_extr_forward.1} parent=1 // pred_check
      _
    $region11: #{_res_extr_forward.1} parent=1 // pred_check_branch
      %38 = sbr.rel (0) target = $region13
    $region12: #{_res_extr_forward.1} parent=1 // pred_region
      %40 = vsyncadd [#allocation6], 0
      %s42 = sshll.u32 %s2, 4
      %s43 = int_to_ptr.hbm [resolvable:$true] %s42
      %s44 = sshll.u32 [#allocation7], 4
      %s45 = int_to_ptr.vmem [resolvable:$true] %s44
      %47 = dma.hbm_to_vmem [thread:$0]  %s43, 16, %s45, [#allocation6]
    $region13: #{_res_extr_forward.1} parent=1 // pred_fallthru
      _
    // Predicated region
    $region14: #{_res_extr_forward.1} parent=1 // pred_check
      _
    $region15: #{_res_extr_forward.1} parent=1 // pred_check_branch
      %49 = sbr.rel (0) target = $region17
    $region16: #{_res_extr_forward.1} parent=1 // pred_region
      %51 = dma.done [#allocation3], 32
    $region17: #{_res_extr_forward.1} parent=1 // pred_fallthru
      _
    // Predicated region
    $region18: #{_res_extr_forward.1} parent=1 // pred_check
      _
    $region19: #{_res_extr_forward.1} parent=1 // pred_check_branch
      %53 = sbr.rel (0) target = $region21
    $region20: #{_res_extr_forward.1} parent=1 // pred_region
      %55 = dma.done [#allocation6], 256
    $region21: #{_res_extr_forward.1} parent=1 // pred_fallthru
      _
    // Predicated region
    $region22: #{_res_extr_forward.1} parent=1 // pred_check
      _
    $region23: #{_res_extr_forward.1} parent=1 // pred_check_branch
      %57 = sbr.rel (0) target = $region25
    $region24: #{_res_extr_forward.1} parent=1 // pred_region
      %59 = dma.done [#allocation6], 16
    $region25: #{_res_extr_forward.1} parent=1 // pred_fallthru
      _
    %v61 = vld [vmem:[#allocation2] sm:$0x3]
    %v62 = vpack.c.bf16 %v61, %v61
    %v63 = vld [vmem:[#allocation5] sm:$0xf]
    %v64 = vld [vmem:[#allocation5 + $0x4] sm:$0xf]
    %v65 = vld [vmem:[#allocation5 + $0x8] sm:$0xf]
    %v66 = vld [vmem:[#allocation5 + $0xc] sm:$0xf]
    %v67 = vld [vmem:[#allocation7] sm:$0x1]
    %v69 = vperm.slane %v67, 0
    %v75 = vunpack.c.l.b16 %v63
    %v76 = vunpack.c.l.b16 %v64
    %v77 = vunpack.c.l.b16 %v65
    %v78 = vunpack.c.l.b16 %v66
    %v79 = vpack.c.b16 %v76, %v75
    %v80 = vpack.c.b16 %v78, %v77
    %vm83 = vcmask 261120
    %v85 = vsel %vm83, %v62, 0
    %87 = vmatpush.bf16.msra.mxu0 0
    %88 = vmatpush.bf16.msra.mxu0 0
    %89 = vmatpush.bf16.msra.mxu0 0
    %90 = vmatpush.bf16.msra.mxu0 0
    %91 = vmatpush.bf16.msra.mxu0 0
    %92 = vmatpush.bf16.msra.mxu0 0
    %93 = vmatpush.bf16.msra.mxu0 %v80
    %94 = vmatpush.bf16.msra.mxu0 %v79
    %95 = vmatmul.bf16.gmra.mxu0 %v85
    %v96 = vpop.f32.mrf.mxu0
    %v97 = vadd.f32 %v69, %v96
    %v98 = vpop.f32.mrf.mxu0
    %99 = vdwg.mxu0
    %vm100 = vcmp.gt.f32.partialorder %v97, 0.5
    %v101 = vsel %vm100, 1.0, 0.0
    %v102 = vpack.c.bf16 %v101, %v101
    %103 = vst [vmem:[#allocation8] sm:$0x1] %v102
    %v104 = vsub.f32 %v101, %v97
    %v105 = vmul.f32 %v104, %v104
    %vm106 = vcmask 1041408
    %v107 = vsel %vm106, %v105, 0.0
    %108 = vadd.xlane.f32.xlu0 %v107
    %v109 = vpop.xlane.xlu0 %108
    %v110 = vrot.slane %v109, 4
    %v111 = vadd.f32 %v109, %v110
    %v112 = vrot.slane %v111, 2
    %v113 = vadd.f32 %v111, %v112
    %v114 = vrot.slane %v113, 1
    %v115 = vadd.f32 %v113, %v114
    %s116 = vtos %v115
    %v117 = vstv %s116
    %118 = vst [vmem:[%s4] sm:$0xff] %v117
    // Predicated region
    $region26: #{_res_extr_forward.1} parent=1 // pred_check
      _
    $region27: #{_res_extr_forward.1} parent=1 // pred_check_branch
      %120 = sbr.rel (0) target = $region29
    $region28: #{_res_extr_forward.1} parent=1 // pred_region
      %122 = vsyncadd [#allocation4], 0
      %s124 = sshll.u32 [#allocation8], 4
      %s125 = int_to_ptr.vmem [resolvable:$true] %s124
      %s126 = sshll.u32 %s3, 4
      %s127 = int_to_ptr.hbm [resolvable:$true] %s126
      %129 = dma.vmem_to_hbm [thread:$0]  %s125, 16, %s127, [#allocation4]
    $region29: #{_res_extr_forward.1} parent=1 // pred_fallthru
      _
    // Predicated region
    $region30: #{_res_extr_forward.1} parent=1 // pred_check
      _
    $region31: #{_res_extr_forward.1} parent=1 // pred_check_branch
      %131 = sbr.rel (0) target = $region33
    $region32: #{_res_extr_forward.1} parent=1 // pred_region
      _
    $region33: #{_res_extr_forward.1} parent=1 // pred_fallthru
      _
    // Predicated region
    $region34: #{_res_extr_forward.1} parent=1 // pred_check
      _
    $region35: #{_res_extr_forward.1} parent=1 // pred_check_branch
      %133 = sbr.rel (0) target = $region37
    $region36: #{_res_extr_forward.1} parent=1 // pred_region
      %135 = dma.done [#allocation4], 16
    $region37: #{_res_extr_forward.1} parent=1 // pred_fallthru
      _
    // Predicated region
    $region38: #{_res_extr_forward.1} parent=1 // pred_check
      _
    $region39: #{_res_extr_forward.1} parent=1 // pred_check_branch
      %137 = sbr.rel (0) target = $region41
    $region40: #{_res_extr_forward.1} parent=1 // pred_region
      _
    $region41: #{_res_extr_forward.1} parent=1 // pred_fallthru
      _
    %138 = vsyncpa [#allocation3], 1
    %139 = vsyncpa [#allocation6], 1
    %140 = vsyncpa [#allocation4], 1

</llo_original>
